<compile_context>
chip_gen: v7x
topology: tpu7x:2x2x1
jax: 0.10.0
libtpu: 0.0.40
codegen_flags: <defaults>
</compile_context>

<pallas_src>
import functools

import jax
import jax.numpy as jnp
from jax import lax
from jax.experimental import pallas as pl
from jax.experimental.pallas import tpu as pltpu

STRIDE = 2   # fixed by the module
KSIZE = 3    # fixed by the module


def conv1d_relu_kernel(r01_ref, r2_ref, w01_ref, w2_ref, b_ref, o_ref, *, precision):
    """One lane-dense column tile (a slab of the flattened batch*L_out axis).

    r01_ref: (2*C_in, CT)   taps 0+1 operand (even phase rows, then odd phase)
    r2_ref:  (C_in,  CT)    tap 2 operand (even phase shifted by one column)
    w01_ref: (C_out, 2*C_in) fused weights for taps 0 and 1
    w2_ref:  (C_out, C_in)   weights for tap 2
    b_ref:   (C_out, 1)      bias (broadcast over the column axis)
    o_ref:   (C_out, CT)     output tile (CT is a multiple of 128 -> unmasked vst)
    """
    acc = jnp.dot(w01_ref[...], r01_ref[...],
                  preferred_element_type=jnp.float32, precision=precision)
    acc = acc + jnp.dot(w2_ref[...], r2_ref[...],
                        preferred_element_type=jnp.float32, precision=precision)
    acc = acc + b_ref[...]                     # (C_out, 1) lane-broadcast
    o_ref[...] = jnp.maximum(acc, 0.0).astype(o_ref.dtype)


def _round_up(v, m):
    return ((v + m - 1) // m) * m


@functools.lru_cache(maxsize=None)
def _vmem_info():
    """(tile budget bytes, vmem_limit_bytes) chosen per TPU generation."""
    try:
        info = pltpu.get_tpu_info()
        cap = int(getattr(info, "vmem_capacity_bytes", 0)) or (64 << 20)
    except Exception:  # pragma: no cover - be robust off-TPU / older jax
        cap = 64 << 20
    if cap >= (100 << 20):          # v5e / v6e class: 128 MiB physical VMEM
        return 64 << 20, 96 << 20
    return 24 << 20, 32 << 20       # v7x class: 64 MiB physical VMEM per TC


def _pick_col_tile(c_in, c_out, cols, itemsize):
    """Column-tile size (multiple of 128) sized from (8,128)-padded VMEM usage."""
    budget, vmem_limit = _vmem_info()
    pad8 = lambda v: _round_up(v, 8)

    # Resident weight/bias blocks (constant index_map), tile-padded, x2 buffers.
    w_bytes = 2 * 4 * (pad8(c_out) * _round_up(2 * c_in, 128)
                       + pad8(c_out) * _round_up(c_in, 128)
                       + pad8(c_out) * 128)
    # Streamed bytes per output column: r01 + r2 inputs (x dtype) and the f32
    # output block, each double-buffered; sublane dims padded to 8.
    per_col = 2 * (itemsize * (pad8(2 * c_in) + pad8(c_in)) + 4 * pad8(c_out))

    avail = max(budget - w_bytes, per_col * 128)
    ct = max(128, (avail // per_col) // 128 * 128)
    ct = min(ct, _round_up(cols, 128), 1 << 16)

    # Prefer >= 2 grid steps (v7x megacore can split the "parallel" axis) when
    # the work is large enough that the ~0.35us/step overhead is noise.
    cols128 = _round_up(cols, 128)
    if ct >= cols128 and cols128 >= 4096:
        ct = _round_up(pl.cdiv(cols128, 2), 128)
    return ct, vmem_limit


@functools.partial(jax.jit, static_argnames=("ct", "vmem_limit", "use_bf16"))
def _conv1_impl(x_ncl, weight, bias, *, ct, vmem_limit, use_bf16):
    n, c_in, l = x_ncl.shape
    c_out = weight.shape[0]
    l_out = (l - KSIZE) // STRIDE + 1
    cols = n * l_out

    # Gather the three conv taps (stride 2) into two contraction operands.
    # Output column j of batch b:  sum_c w0*x[b,c,2j] + w1*x[b,c,2j+1] + w2*x[b,c,2j+2]
    e0 = x_ncl[:, :, 0:2 * l_out:2]          # (N, C_in, L_out)  x[.., 2j]
    o0 = x_ncl[:, :, 1:2 * l_out:2]          # (N, C_in, L_out)  x[.., 2j+1]
    e1 = x_ncl[:, :, 2:2 * l_out + 1:2]      # (N, C_in, L_out)  x[.., 2j+2]

    r01 = jnp.concatenate([e0, o0], axis=1)                       # (N, 2C_in, L_out)
    r01 = jnp.transpose(r01, (1, 0, 2)).reshape(2 * c_in, cols)   # (2C_in, N*L_out)
    r2 = jnp.transpose(e1, (1, 0, 2)).reshape(c_in, cols)         # (C_in,  N*L_out)

    w01 = jnp.concatenate([weight[:, :, 0], weight[:, :, 1]], axis=1)  # (C_out, 2C_in)
    w2 = weight[:, :, 2]                                               # (C_out, C_in)
    b2 = bias.reshape(c_out, 1).astype(jnp.float32)                    # (C_out, 1)

    if use_bf16:
        r01 = r01.astype(jnp.bfloat16)
        r2 = r2.astype(jnp.bfloat16)
        w01 = w01.astype(jnp.bfloat16)
        w2 = w2.astype(jnp.bfloat16)
        precision = None
    else:
        precision = lax.Precision.HIGHEST

    cols_pad = pl.cdiv(cols, ct) * ct
    if cols_pad != cols:
        r01 = jnp.pad(r01, ((0, 0), (0, cols_pad - cols)))
        r2 = jnp.pad(r2, ((0, 0), (0, cols_pad - cols)))

    out = pl.pallas_call(
        functools.partial(conv1d_relu_kernel, precision=precision),
        out_shape=jax.ShapeDtypeStruct((c_out, cols_pad), jnp.float32),
        grid=(cols_pad // ct,),
        in_specs=[
            pl.BlockSpec((2 * c_in, ct), lambda i: (0, i)),
            pl.BlockSpec((c_in, ct), lambda i: (0, i)),
            pl.BlockSpec((c_out, 2 * c_in), lambda i: (0, 0)),
            pl.BlockSpec((c_out, c_in), lambda i: (0, 0)),
            pl.BlockSpec((c_out, 1), lambda i: (0, 0)),
        ],
        out_specs=pl.BlockSpec((c_out, ct), lambda i: (0, i)),
        compiler_params=pltpu.CompilerParams(
            dimension_semantics=("parallel",),
            vmem_limit_bytes=vmem_limit,
        ),
    )(r01, r2, w01, w2, b2)

    # Layout plumbing back to PyTorch's (N, C_out, L_out) -- plain XLA.
    out = out[:, :cols].reshape(c_out, n, l_out)
    return jnp.transpose(out, (1, 0, 2))


def conv1_forward(x_ncl, weight, bias, *, use_bf16=False):
    """Equivalent of Conv1.forward: relu(conv1d(x, weight, bias, stride=2)).

    x_ncl:  (N, C_in, L)      -- PyTorch NCL layout
    weight: (C_out, C_in, 3)  -- PyTorch Conv1d weight layout
    bias:   (C_out,)
    returns (N, C_out, L_out), L_out = (L - 3)//2 + 1
    """
    n, c_in, l = x_ncl.shape
    c_out, c_in_w, k = weight.shape
    assert c_in_w == c_in and k == KSIZE
    assert l >= KSIZE
    l_out = (l - KSIZE) // STRIDE + 1
    itemsize = 2 if use_bf16 else jnp.dtype(x_ncl.dtype).itemsize
    ct, vmem_limit = _pick_col_tile(c_in, c_out, n * l_out, itemsize)
    return _conv1_impl(x_ncl, weight, bias,
                       ct=ct, vmem_limit=vmem_limit, use_bf16=use_bf16)


def _reference(x_ncl, weight, bias):
    """Pure-JAX reference (matches torch.nn.functional.conv1d + relu)."""
    y = lax.conv_general_dilated(
        x_ncl, weight, window_strides=(STRIDE,), padding="VALID",
        dimension_numbers=("NCH", "OIH", "NCH"),
        precision=lax.Precision.HIGHEST)
    return jnp.maximum(y + bias[None, :, None], 0.0)


def _run_case(key, n, c_in, l, c_out):
    kx, kw, kb = jax.random.split(key, 3)
    x = jax.random.normal(kx, (n, c_in, l), dtype=jnp.float32)
    bound = 1.0 / float(c_in * KSIZE) ** 0.5
    w = jax.random.uniform(kw, (c_out, c_in, KSIZE), jnp.float32, -bound, bound)
    b = jax.random.uniform(kb, (c_out,), jnp.float32, -bound, bound)

    out = jax.block_until_ready(conv1_forward(x, w, b))
    ref = _reference(x, w, b)
    l_out = (l - KSIZE) // STRIDE + 1
    assert out.shape == (n, c_out, l_out), out.shape
    assert jnp.allclose(out, ref, atol=1e-4, rtol=1e-4), "mismatch vs reference"


if __name__ == "__main__":
    key = jax.random.PRNGKey(0)
    k1, k2 = jax.random.split(key)

    # Primary shapes consistent with the module: N=2, C_in=4, L=16, C_out=8, K=3.
    _run_case(k1, n=2, c_in=4, l=16, c_out=8)
    # Secondary: odd L and a column count that exercises the padding/slice-off
    # path of the flattened (batch * L_out) lane axis.
    _run_case(k2, n=3, c_in=4, l=15, c_out=8)

    print("KERNEL_OK")
</pallas_src>

<mosaic_0001>
module attributes {stable_mosaic.version = 11 : i64} {
  func.func @conv1d_relu_kernel(%arg0: i32, %arg1: memref<8x128xf32, #tpu.memory_space<vmem>>, %arg2: memref<4x128xf32, #tpu.memory_space<vmem>>, %arg3: memref<8x8xf32, #tpu.memory_space<vmem>>, %arg4: memref<8x4xf32, #tpu.memory_space<vmem>>, %arg5: memref<8x1xf32, #tpu.memory_space<vmem>>, %arg6: memref<8x128xf32, #tpu.memory_space<vmem>>) attributes {dimension_semantics = [#tpu.dimension_semantics<parallel>], iteration_bounds = array<i64: 1>, scalar_prefetch = 0 : i64, scratch_operands = 0 : i64, tpu.core_type = #tpu.core_type<tc>, window_params = [{transform_indices = @transform_0, window_bounds = array<i64: 8, 128>}, {transform_indices = @transform_1, window_bounds = array<i64: 4, 128>}, {pipeline_mode = #tpu.pipeline_mode<synchronous>, transform_indices = @transform_2, window_bounds = array<i64: 8, 8>}, {pipeline_mode = #tpu.pipeline_mode<synchronous>, transform_indices = @transform_3, window_bounds = array<i64: 8, 4>}, {pipeline_mode = #tpu.pipeline_mode<synchronous>, transform_indices = @transform_4, window_bounds = array<i64: 8, 1>}, {transform_indices = @transform_5, window_bounds = array<i64: 8, 128>}]} {
    %c0 = arith.constant 0 : index
    %c0_0 = arith.constant 0 : index
    %0 = vector.load %arg3[%c0, %c0_0] : memref<8x8xf32, #tpu.memory_space<vmem>>, vector<8x8xf32>
    %c0_1 = arith.constant 0 : index
    %c0_2 = arith.constant 0 : index
    %1 = vector.load %arg1[%c0_1, %c0_2] : memref<8x128xf32, #tpu.memory_space<vmem>>, vector<8x128xf32>
    %cst = arith.constant dense<0.000000e+00> : vector<8x128xf32>
    %2 = tpu.matmul %0, %1, %cst {dimension_numbers = #tpu.dot_dimension_numbers<[1], [0], [0], [1], [0, 0, 1, 1], [], []>, precision = #tpu.contract_precision<fp32>} : vector<8x8xf32>, vector<8x128xf32>, vector<8x128xf32> -> vector<8x128xf32>
    %c0_3 = arith.constant 0 : index
    %c0_4 = arith.constant 0 : index
    %3 = vector.load %arg4[%c0_3, %c0_4] : memref<8x4xf32, #tpu.memory_space<vmem>>, vector<8x4xf32>
    %c0_5 = arith.constant 0 : index
    %c0_6 = arith.constant 0 : index
    %4 = vector.load %arg2[%c0_5, %c0_6] : memref<4x128xf32, #tpu.memory_space<vmem>>, vector<4x128xf32>
    %cst_7 = arith.constant dense<0.000000e+00> : vector<8x128xf32>
    %5 = tpu.matmul %3, %4, %cst_7 {dimension_numbers = #tpu.dot_dimension_numbers<[1], [0], [0], [1], [0, 0, 1, 1], [], []>, precision = #tpu.contract_precision<fp32>} : vector<8x4xf32>, vector<4x128xf32>, vector<8x128xf32> -> vector<8x128xf32>
    %6 = arith.addf %2, %5 : vector<8x128xf32>
    %c0_8 = arith.constant 0 : index
    %c0_9 = arith.constant 0 : index
    %7 = vector.load %arg5[%c0_8, %c0_9] : memref<8x1xf32, #tpu.memory_space<vmem>>, vector<8x1xf32>
    %8 = vector.broadcast %7 : vector<8x1xf32> to vector<8x128xf32>
    %9 = arith.addf %6, %8 : vector<8x128xf32>
    %cst_10 = arith.constant 0.000000e+00 : f32
    %10 = vector.broadcast %cst_10 : f32 to vector<8x128xf32>
    %11 = arith.maximumf %9, %10 : vector<8x128xf32>
    %c0_11 = arith.constant 0 : index
    %c0_12 = arith.constant 0 : index
    %12 = vector.load %arg6[%c0_11, %c0_12] : memref<8x128xf32, #tpu.memory_space<vmem>>, vector<8x128xf32>
    tpu.vector_store %arg6[%c0_11, %c0_12], %11 {strides = array<i32>} : memref<8x128xf32, #tpu.memory_space<vmem>>, vector<8x128xf32>,
    return
  }
  func.func @transform_0(%arg0: i32) -> (i32, i32) {
    %c0_i32 = arith.constant 0 : i32
    %c0_i32_0 = arith.constant 0 : i32
    return %c0_i32, %arg0 : i32, i32
  }
  func.func @transform_1(%arg0: i32) -> (i32, i32) {
    %c0_i32 = arith.constant 0 : i32
    %c0_i32_0 = arith.constant 0 : i32
    return %c0_i32, %arg0 : i32, i32
  }
  func.func @transform_2(%arg0: i32) -> (i32, i32) {
    %c0_i32 = arith.constant 0 : i32
    %c0_i32_0 = arith.constant 0 : i32
    %c0_i32_1 = arith.constant 0 : i32
    return %c0_i32, %c0_i32_0 : i32, i32
  }
  func.func @transform_3(%arg0: i32) -> (i32, i32) {
    %c0_i32 = arith.constant 0 : i32
    %c0_i32_0 = arith.constant 0 : i32
    %c0_i32_1 = arith.constant 0 : i32
    return %c0_i32, %c0_i32_0 : i32, i32
  }
  func.func @transform_4(%arg0: i32) -> (i32, i32) {
    %c0_i32 = arith.constant 0 : i32
    %c0_i32_0 = arith.constant 0 : i32
    %c0_i32_1 = arith.constant 0 : i32
    return %c0_i32, %c0_i32_0 : i32, i32
  }
  func.func @transform_5(%arg0: i32) -> (i32, i32) {
    %c0_i32 = arith.constant 0 : i32
    %c0_i32_0 = arith.constant 0 : i32
    return %c0_i32, %arg0 : i32, i32
  }
}

</mosaic_0001>

<llo_original>
// kernel: _conv1_impl.1
$region0: #{_conv1_impl.1}
  #allocation0 [shape = 'u32[]', space=smem, size = 0x4, offset = 0x4, fixed_abs, tag = 'smem constant byte address 0x4 - core index']
  #allocation1 [shape = 'u32[144,128]{1,0:T(1,128)}', space=vmem, size = 0x12000, scoped, tag = 'internal scratch']
  %s0 = inlined_call_operand.vmem [shape: f32[8,128], index: 0, kind: input, shape index: {}]
  %s1 = inlined_call_operand.vmem [shape: f32[4,128], index: 1, kind: input, shape index: {}]
  %s2 = inlined_call_operand.vmem [shape: f32[8,8], index: 2, kind: input, shape index: {}]
  %s3 = inlined_call_operand.vmem [shape: f32[8,4], index: 3, kind: input, shape index: {}]
  %s4 = inlined_call_operand.vmem [shape: f32[8,1], index: 4, kind: input, shape index: {}]
  %s5 = inlined_call_operand.vmem [shape: f32[8,128], index: 5, kind: output, shape index: {}]
  %s6 = sld [smem:[#allocation0]]
  $region30: #{_conv1_impl.1} parent=0
    _
  %s8 = ssub.s32 1, %s6
  %s9 = scalar_select 0, %s8, %s6
  // Predicated region
  $region2: #{_conv1_impl.1} parent=0 // pred_check
    _
  $region3: #{_conv1_impl.1} parent=0 // pred_check_branch
    %11 = sbr.rel (0) target = $region5
  $region4: #{_conv1_impl.1} parent=0 // pred_region
    _
  $region5: #{_conv1_impl.1} parent=0 // pred_fallthru
    _
  // Predicated region
  $region6: #{_conv1_impl.1} parent=0 // pred_check
    _
  $region7: #{_conv1_impl.1} parent=0 // pred_check_branch
    %13 = sbr.rel (0) target = $region9
  $region8: #{_conv1_impl.1} parent=0 // pred_region
    _
  $region9: #{_conv1_impl.1} parent=0 // pred_fallthru
    _
  // Predicated region
  $region10: #{_conv1_impl.1} parent=0 // pred_check
    _
  $region11: #{_conv1_impl.1} parent=0 // pred_check_branch
    %15 = sbr.rel (0) target = $region13
  $region12: #{_conv1_impl.1} parent=0 // pred_region
    _
  $region13: #{_conv1_impl.1} parent=0 // pred_fallthru
    _
  // Predicated region
  $region14: #{_conv1_impl.1} parent=0 // pred_check
    _
  $region15: #{_conv1_impl.1} parent=0 // pred_check_branch
    %17 = sbr.rel (0) target = $region17
  $region16: #{_conv1_impl.1} parent=0 // pred_region
    _
  $region17: #{_conv1_impl.1} parent=0 // pred_fallthru
    _
  // Predicated region
  $region18: #{_conv1_impl.1} parent=0 // pred_check
    _
  $region19: #{_conv1_impl.1} parent=0 // pred_check_branch
    %19 = sbr.rel (0) target = $region21
  $region20: #{_conv1_impl.1} parent=0 // pred_region
    _
  $region21: #{_conv1_impl.1} parent=0 // pred_fallthru
    _
  %v20 = vld [vmem:[%s2] sm:$0xff]
  %v21 = vld [vmem:[%s0] sm:$0xff]
  %v22 = vld [vmem:[%s3] sm:$0xff]
  %v23 = vld [vmem:[%s1] sm:$0xf]
  %vm24 = vcmask 31744
  %v26 = vsel %vm24, %v22, 0
  %vm28 = vcmask 1043456
  %v30 = vsel %vm28, %v23, 0
  %32 = vmatprep.subr.mxu0 0.0
  %v33 = vand.u32 %v30, 4294901760
  %34 = vmatpush1.msra.mxu0 %v33
  %35 = vmatprep.subr.mxu0 0.0
  %36 = vmatpush1.msra.mxu0 0.0
  %37 = vmatprep.subr.mxu0 0.0
  %38 = vmatpush1.msra.mxu0 0.0
  %39 = vmatprep.subr.mxu0 0.0
  %40 = vmatpush1.msra.mxu0 0.0
  %41 = vmatprep.subr.mxu0 0.0
  %42 = vmatpush1.msra.mxu0 0.0
  %43 = vmatprep.subr.mxu0 0.0
  %44 = vmatpush1.msra.mxu0 0.0
  %45 = vmatprep.subr.mxu0 0.0
  %46 = vmatpush1.msra.mxu0 0.0
  %47 = vmatprep.subr.mxu0 0.0
  %48 = vmatpush1.msra.mxu0 0.0
  %49 = vmatprep.subr.mxu0 0.0
  %50 = vmatpush1.msra.mxu0 0.0
  %51 = vmatprep.subr.mxu0 0.0
  %52 = vmatpush1.msra.mxu0 0.0
  %53 = vmatprep.subr.mxu0 0.0
  %54 = vmatpush1.msra.mxu0 0.0
  %55 = vmatprep.subr.mxu0 0.0
  %56 = vmatpush1.msra.mxu0 0.0
  %57 = vmatprep.subr.mxu0 0.0
  %58 = vmatpush1.msra.mxu0 0.0
  %59 = vmatprep.subr.mxu0 0.0
  %60 = vmatpush1.msra.mxu0 0.0
  %61 = vmatprep.subr.mxu0 0.0
  %62 = vmatpush1.msra.mxu0 0.0
  %63 = vmatprep.subr.mxu0 0.0
  %64 = vmatpush1.msra.mxu0 0.0
  %65 = vmatprep.subr.mxu0 0.0
  %66 = vmatpush1.msra.mxu0 0.0
  %67 = vmatprep.subr.mxu0 0.0
  %68 = vmatpush1.msra.mxu0 0.0
  %69 = vmatprep.subr.mxu0 0.0
  %70 = vmatpush1.msra.mxu0 0.0
  %71 = vmatprep.subr.mxu0 0.0
  %72 = vmatpush1.msra.mxu0 0.0
  %73 = vmatprep.subr.mxu0 0.0
  %74 = vmatpush1.msra.mxu0 0.0
  %75 = vmatprep.subr.mxu0 0.0
  %76 = vmatpush1.msra.mxu0 0.0
  %77 = vmatprep.subr.mxu0 0.0
  %78 = vmatpush1.msra.mxu0 0.0
  %79 = vmatprep.subr.mxu0 0.0
  %80 = vmatpush1.msra.mxu0 0.0
  %81 = vmatprep.subr.mxu0 0.0
  %82 = vmatpush1.msra.mxu0 0.0
  %83 = vmatprep.subr.mxu0 0.0
  %84 = vmatpush1.msra.mxu0 0.0
  %85 = vmatprep.subr.mxu0 0.0
  %86 = vmatpush1.msra.mxu0 0.0
  %87 = vmatprep.subr.mxu0 0.0
  %88 = vmatpush1.msra.mxu0 0.0
  %89 = vmatprep.subr.mxu0 0.0
  %90 = vmatpush1.msra.mxu0 0.0
  %91 = vmatprep.subr.mxu0 0.0
  %92 = vmatpush1.msra.mxu0 0.0
  %93 = vmatprep.subr.mxu0 0.0
  %94 = vmatpush1.msra.mxu0 0.0
  %95 = vmatprep.subr.mxu0 0.0
  %96 = vmatpush1.msra.mxu0 0.0
  %97 = vmatprep.mubr.f32.mxu0 0.0
  %v98 = vand.u32 %v26, 4294901760
  %v99 = vsub.f32 %v26, %v98
  %v100 = vand.u32 %v99, 4294901760
  %v101 = vsub.f32 %v99, %v100
  %v102 = vand.u32 %v101, 4294901760
  %103 = vmatmul.mubr.f32.gmra.mrb[0].mxu0 %v102
  %v104 = vpop.f32.mrb[0].mxu0
  %v105 = vadd.f32 0.0, %v104
  %v106 = vpop.f32.mrb[0].mxu0
  %107 = vdwg.mxu0
  %108 = vmatprep.subr.mxu0 0.0
  %v109 = vand.u32 %v30, 4294901760
  %v110 = vsub.f32 %v30, %v109
  %v111 = vand.u32 %v110, 4294901760
  %v112 = vsub.f32 %v110, %v111
  %v113 = vand.u32 %v112, 4294901760
  %114 = vmatpush1.msra.mxu0 %v113
  %115 = vmatprep.subr.mxu0 0.0
  %116 = vmatpush1.msra.mxu0 0.0
  %117 = vmatprep.subr.mxu0 0.0
  %118 = vmatpush1.msra.mxu0 0.0
  %119 = vmatprep.subr.mxu0 0.0
  %120 = vmatpush1.msra.mxu0 0.0
  %121 = vmatprep.subr.mxu0 0.0
  %122 = vmatpush1.msra.mxu0 0.0
  %123 = vmatprep.subr.mxu0 0.0
  %124 = vmatpush1.msra.mxu0 0.0
  %125 = vmatprep.subr.mxu0 0.0
  %126 = vmatpush1.msra.mxu0 0.0
  %127 = vmatprep.subr.mxu0 0.0
  %128 = vmatpush1.msra.mxu0 0.0
  %129 = vmatprep.subr.mxu0 0.0
  %130 = vmatpush1.msra.mxu0 0.0
  %131 = vmatprep.subr.mxu0 0.0
  %132 = vmatpush1.msra.mxu0 0.0
  %133 = vmatprep.subr.mxu0 0.0
  %134 = vmatpush1.msra.mxu0 0.0
  %135 = vmatprep.subr.mxu0 0.0
  %136 = vmatpush1.msra.mxu0 0.0
  %137 = vmatprep.subr.mxu0 0.0
  %138 = vmatpush1.msra.mxu0 0.0
  %139 = vmatprep.subr.mxu0 0.0
  %140 = vmatpush1.msra.mxu0 0.0
  %141 = vmatprep.subr.mxu0 0.0
  %142 = vmatpush1.msra.mxu0 0.0
  %143 = vmatprep.subr.mxu0 0.0
  %144 = vmatpush1.msra.mxu0 0.0
  %145 = vmatprep.subr.mxu0 0.0
  %146 = vmatpush1.msra.mxu0 0.0
  %147 = vmatprep.subr.mxu0 0.0
  %148 = vmatpush1.msra.mxu0 0.0
  %149 = vmatprep.subr.mxu0 0.0
  %150 = vmatpush1.msra.mxu0 0.0
  %151 = vmatprep.subr.mxu0 0.0
  %152 = vmatpush1.msra.mxu0 0.0
  %153 = vmatprep.subr.mxu0 0.0
  %154 = vmatpush1.msra.mxu0 0.0
  %155 = vmatprep.subr.mxu0 0.0
  %156 = vmatpush1.msra.mxu0 0.0
  %157 = vmatprep.subr.mxu0 0.0
  %158 = vmatpush1.msra.mxu0 0.0
  %159 = vmatprep.subr.mxu0 0.0
  %160 = vmatpush1.msra.mxu0 0.0
  %161 = vmatprep.subr.mxu0 0.0
  %162 = vmatpush1.msra.mxu0 0.0
  %163 = vmatprep.subr.mxu0 0.0
  %164 = vmatpush1.msra.mxu0 0.0
  %165 = vmatprep.subr.mxu0 0.0
  %166 = vmatpush1.msra.mxu0 0.0
  %167 = vmatprep.subr.mxu0 0.0
  %168 = vmatpush1.msra.mxu0 0.0
  %169 = vmatprep.subr.mxu0 0.0
  %170 = vmatpush1.msra.mxu0 0.0
  %171 = vmatprep.subr.mxu0 0.0
  %172 = vmatpush1.msra.mxu0 0.0
  %173 = vmatprep.subr.mxu0 0.0
  %174 = vmatpush1.msra.mxu0 0.0
  %175 = vmatprep.subr.mxu0 0.0
  %176 = vmatpush1.msra.mxu0 0.0
  %177 = vmatprep.mubr.f32.mxu0 0.0
  %v178 = vand.u32 %v26, 4294901760
  %179 = vmatmul.mubr.f32.gmra.mrb[0].mxu0 %v178
  %v180 = vpop.f32.mrb[0].mxu0
  %v181 = vadd.f32 %v105, %v180
  %v182 = vpop.f32.mrb[0].mxu0
  %183 = vdwg.mxu0
  %184 = vmatprep.subr.mxu0 0.0
  %v185 = vand.u32 %v30, 4294901760
  %v186 = vsub.f32 %v30, %v185
  %187 = vmatpush1.msra.mxu0 %v186
  %188 = vmatprep.subr.mxu0 0.0
  %189 = vmatpush1.msra.mxu0 0.0
  %190 = vmatprep.subr.mxu0 0.0
  %191 = vmatpush1.msra.mxu0 0.0
  %192 = vmatprep.subr.mxu0 0.0
  %193 = vmatpush1.msra.mxu0 0.0
  %194 = vmatprep.subr.mxu0 0.0
  %195 = vmatpush1.msra.mxu0 0.0
  %196 = vmatprep.subr.mxu0 0.0
  %197 = vmatpush1.msra.mxu0 0.0
  %198 = vmatprep.subr.mxu0 0.0
  %199 = vmatpush1.msra.mxu0 0.0
  %200 = vmatprep.subr.mxu0 0.0
  %201 = vmatpush1.msra.mxu0 0.0
  %202 = vmatprep.subr.mxu0 0.0
  %203 = vmatpush1.msra.mxu0 0.0
  %204 = vmatprep.subr.mxu0 0.0
  %205 = vmatpush1.msra.mxu0 0.0
  %206 = vmatprep.subr.mxu0 0.0
  %207 = vmatpush1.msra.mxu0 0.0
  %208 = vmatprep.subr.mxu0 0.0
  %209 = vmatpush1.msra.mxu0 0.0
  %210 = vmatprep.subr.mxu0 0.0
  %211 = vmatpush1.msra.mxu0 0.0
  %212 = vmatprep.subr.mxu0 0.0
  %213 = vmatpush1.msra.mxu0 0.0
  %214 = vmatprep.subr.mxu0 0.0
  %215 = vmatpush1.msra.mxu0 0.0
  %216 = vmatprep.subr.mxu0 0.0
  %217 = vmatpush1.msra.mxu0 0.0
  %218 = vmatprep.subr.mxu0 0.0
  %219 = vmatpush1.msra.mxu0 0.0
  %220 = vmatprep.subr.mxu0 0.0
  %221 = vmatpush1.msra.mxu0 0.0
  %222 = vmatprep.subr.mxu0 0.0
  %223 = vmatpush1.msra.mxu0 0.0
  %224 = vmatprep.subr.mxu0 0.0
  %225 = vmatpush1.msra.mxu0 0.0
  %226 = vmatprep.subr.mxu0 0.0
  %227 = vmatpush1.msra.mxu0 0.0
  %228 = vmatprep.subr.mxu0 0.0
  %229 = vmatpush1.msra.mxu0 0.0
  %230 = vmatprep.subr.mxu0 0.0
  %231 = vmatpush1.msra.mxu0 0.0
  %232 = vmatprep.subr.mxu0 0.0
  %233 = vmatpush1.msra.mxu0 0.0
  %234 = vmatprep.subr.mxu0 0.0
  %235 = vmatpush1.msra.mxu0 0.0
  %236 = vmatprep.subr.mxu0 0.0
  %237 = vmatpush1.msra.mxu0 0.0
  %238 = vmatprep.subr.mxu0 0.0
  %239 = vmatpush1.msra.mxu0 0.0
  %240 = vmatprep.subr.mxu0 0.0
  %241 = vmatpush1.msra.mxu0 0.0
  %242 = vmatprep.subr.mxu0 0.0
  %243 = vmatpush1.msra.mxu0 0.0
  %244 = vmatprep.subr.mxu0 0.0
  %245 = vmatpush1.msra.mxu0 0.0
  %246 = vmatprep.subr.mxu0 0.0
  %247 = vmatpush1.msra.mxu0 0.0
  %248 = vmatprep.subr.mxu0 0.0
  %249 = vmatpush1.msra.mxu0 0.0
  %250 = vmatprep.mubr.f32.mxu0 0.0
  %v251 = vand.u32 %v26, 4294901760
  %v252 = vsub.f32 %v26, %v251
  %253 = vmatmul.mubr.f32.gmra.mrb[0].mxu0 %v252
  %v254 = vpop.f32.mrb[0].mxu0
  %v255 = vadd.f32 %v181, %v254
  %v256 = vpop.f32.mrb[0].mxu0
  %257 = vdwg.mxu0
  %258 = vmatprep.subr.mxu0 0.0
  %v259 = vand.u32 %v30, 4294901760
  %260 = vmatpush1.msra.mxu0 %v259
  %261 = vmatprep.subr.mxu0 0.0
  %262 = vmatpush1.msra.mxu0 0.0
  %263 = vmatprep.subr.mxu0 0.0
  %264 = vmatpush1.msra.mxu0 0.0
  %265 = vmatprep.subr.mxu0 0.0
  %266 = vmatpush1.msra.mxu0 0.0
  %267 = vmatprep.subr.mxu0 0.0
  %268 = vmatpush1.msra.mxu0 0.0
  %269 = vmatprep.subr.mxu0 0.0
  %270 = vmatpush1.msra.mxu0 0.0
  %271 = vmatprep.subr.mxu0 0.0
  %272 = vmatpush1.msra.mxu0 0.0
  %273 = vmatprep.subr.mxu0 0.0
  %274 = vmatpush1.msra.mxu0 0.0
  %275 = vmatprep.subr.mxu0 0.0
  %276 = vmatpush1.msra.mxu0 0.0
  %277 = vmatprep.subr.mxu0 0.0
  %278 = vmatpush1.msra.mxu0 0.0
  %279 = vmatprep.subr.mxu0 0.0
  %280 = vmatpush1.msra.mxu0 0.0
  %281 = vmatprep.subr.mxu0 0.0
  %282 = vmatpush1.msra.mxu0 0.0
  %283 = vmatprep.subr.mxu0 0.0
  %284 = vmatpush1.msra.mxu0 0.0
  %285 = vmatprep.subr.mxu0 0.0
  %286 = vmatpush1.msra.mxu0 0.0
  %287 = vmatprep.subr.mxu0 0.0
  %288 = vmatpush1.msra.mxu0 0.0
  %289 = vmatprep.subr.mxu0 0.0
  %290 = vmatpush1.msra.mxu0 0.0
  %291 = vmatprep.subr.mxu0 0.0
  %292 = vmatpush1.msra.mxu0 0.0
  %293 = vmatprep.subr.mxu0 0.0
  %294 = vmatpush1.msra.mxu0 0.0
  %295 = vmatprep.subr.mxu0 0.0
  %296 = vmatpush1.msra.mxu0 0.0
  %297 = vmatprep.subr.mxu0 0.0
  %298 = vmatpush1.msra.mxu0 0.0
  %299 = vmatprep.subr.mxu0 0.0
  %300 = vmatpush1.msra.mxu0 0.0
  %301 = vmatprep.subr.mxu0 0.0
  %302 = vmatpush1.msra.mxu0 0.0
  %303 = vmatprep.subr.mxu0 0.0
  %304 = vmatpush1.msra.mxu0 0.0
  %305 = vmatprep.subr.mxu0 0.0
  %306 = vmatpush1.msra.mxu0 0.0
  %307 = vmatprep.subr.mxu0 0.0
  %308 = vmatpush1.msra.mxu0 0.0
  %309 = vmatprep.subr.mxu0 0.0
  %310 = vmatpush1.msra.mxu0 0.0
  %311 = vmatprep.subr.mxu0 0.0
  %312 = vmatpush1.msra.mxu0 0.0
  %313 = vmatprep.subr.mxu0 0.0
  %314 = vmatpush1.msra.mxu0 0.0
  %315 = vmatprep.subr.mxu0 0.0
  %316 = vmatpush1.msra.mxu0 0.0
  %317 = vmatprep.subr.mxu0 0.0
  %318 = vmatpush1.msra.mxu0 0.0
  %319 = vmatprep.subr.mxu0 0.0
  %320 = vmatpush1.msra.mxu0 0.0
  %321 = vmatprep.subr.mxu0 0.0
  %322 = vmatpush1.msra.mxu0 0.0
  %323 = vmatprep.mubr.f32.mxu0 0.0
  %v324 = vand.u32 %v26, 4294901760
  %v325 = vsub.f32 %v26, %v324
  %v326 = vand.u32 %v325, 4294901760
  %327 = vmatmul.mubr.f32.gmra.mrb[0].mxu0 %v326
  %v328 = vpop.f32.mrb[0].mxu0
  %v329 = vadd.f32 %v255, %v328
  %v330 = vpop.f32.mrb[0].mxu0
  %331 = vdwg.mxu0
  %332 = vmatprep.subr.mxu0 0.0
  %v333 = vand.u32 %v30, 4294901760
  %v334 = vsub.f32 %v30, %v333
  %v335 = vand.u32 %v334, 4294901760
  %336 = vmatpush1.msra.mxu0 %v335
  %337 = vmatprep.subr.mxu0 0.0
  %338 = vmatpush1.msra.mxu0 0.0
  %339 = vmatprep.subr.mxu0 0.0
  %340 = vmatpush1.msra.mxu0 0.0
  %341 = vmatprep.subr.mxu0 0.0
  %342 = vmatpush1.msra.mxu0 0.0
  %343 = vmatprep.subr.mxu0 0.0
  %344 = vmatpush1.msra.mxu0 0.0
  %345 = vmatprep.subr.mxu0 0.0
  %346 = vmatpush1.msra.mxu0 0.0
  %347 = vmatprep.subr.mxu0 0.0
  %348 = vmatpush1.msra.mxu0 0.0
  %349 = vmatprep.subr.mxu0 0.0
  %350 = vmatpush1.msra.mxu0 0.0
  %351 = vmatprep.subr.mxu0 0.0
  %352 = vmatpush1.msra.mxu0 0.0
  %353 = vmatprep.subr.mxu0 0.0
  %354 = vmatpush1.msra.mxu0 0.0
  %355 = vmatprep.subr.mxu0 0.0
  %356 = vmatpush1.msra.mxu0 0.0
  %357 = vmatprep.subr.mxu0 0.0
  %358 = vmatpush1.msra.mxu0 0.0
  %359 = vmatprep.subr.mxu0 0.0
  %360 = vmatpush1.msra.mxu0 0.0
  %361 = vmatprep.subr.mxu0 0.0
  %362 = vmatpush1.msra.mxu0 0.0
  %363 = vmatprep.subr.mxu0 0.0
  %364 = vmatpush1.msra.mxu0 0.0
  %365 = vmatprep.subr.mxu0 0.0
  %366 = vmatpush1.msra.mxu0 0.0
  %367 = vmatprep.subr.mxu0 0.0
  %368 = vmatpush1.msra.mxu0 0.0
  %369 = vmatprep.subr.mxu0 0.0
  %370 = vmatpush1.msra.mxu0 0.0
  %371 = vmatprep.subr.mxu0 0.0
  %372 = vmatpush1.msra.mxu0 0.0
  %373 = vmatprep.subr.mxu0 0.0
  %374 = vmatpush1.msra.mxu0 0.0
  %375 = vmatprep.subr.mxu0 0.0
  %376 = vmatpush1.msra.mxu0 0.0
  %377 = vmatprep.subr.mxu0 0.0
  %378 = vmatpush1.msra.mxu0 0.0
  %379 = vmatprep.subr.mxu0 0.0
  %380 = vmatpush1.msra.mxu0 0.0
  %381 = vmatprep.subr.mxu0 0.0
  %382 = vmatpush1.msra.mxu0 0.0
  %383 = vmatprep.subr.mxu0 0.0
  %384 = vmatpush1.msra.mxu0 0.0
  %385 = vmatprep.subr.mxu0 0.0
  %386 = vmatpush1.msra.mxu0 0.0
  %387 = vmatprep.subr.mxu0 0.0
  %388 = vmatpush1.msra.mxu0 0.0
  %389 = vmatprep.subr.mxu0 0.0
  %390 = vmatpush1.msra.mxu0 0.0
  %391 = vmatprep.subr.mxu0 0.0
  %392 = vmatpush1.msra.mxu0 0.0
  %393 = vmatprep.subr.mxu0 0.0
  %394 = vmatpush1.msra.mxu0 0.0
  %395 = vmatprep.subr.mxu0 0.0
  %396 = vmatpush1.msra.mxu0 0.0
  %397 = vmatprep.subr.mxu0 0.0
  %398 = vmatpush1.msra.mxu0 0.0
  %399 = vmatprep.mubr.f32.mxu0 0.0
  %v400 = vand.u32 %v26, 4294901760
  %401 = vmatmul.mubr.f32.gmra.mrb[0].mxu0 %v400
  %v402 = vpop.f32.mrb[0].mxu0
  %v403 = vadd.f32 %v329, %v402
  %v404 = vpop.f32.mrb[0].mxu0
  %405 = vdwg.mxu0
  %406 = vmatprep.subr.mxu0 0.0
  %v407 = vand.u32 %v30, 4294901760
  %408 = vmatpush1.msra.mxu0 %v407
  %409 = vmatprep.subr.mxu0 0.0
  %410 = vmatpush1.msra.mxu0 0.0
  %411 = vmatprep.subr.mxu0 0.0
  %412 = vmatpush1.msra.mxu0 0.0
  %413 = vmatprep.subr.mxu0 0.0
  %414 = vmatpush1.msra.mxu0 0.0
  %415 = vmatprep.subr.mxu0 0.0
  %416 = vmatpush1.msra.mxu0 0.0
  %417 = vmatprep.subr.mxu0 0.0
  %418 = vmatpush1.msra.mxu0 0.0
  %419 = vmatprep.subr.mxu0 0.0
  %420 = vmatpush1.msra.mxu0 0.0
  %421 = vmatprep.subr.mxu0 0.0
  %422 = vmatpush1.msra.mxu0 0.0
  %423 = vmatprep.subr.mxu0 0.0
  %424 = vmatpush1.msra.mxu0 0.0
  %425 = vmatprep.subr.mxu0 0.0
  %426 = vmatpush1.msra.mxu0 0.0
  %427 = vmatprep.subr.mxu0 0.0
  %428 = vmatpush1.msra.mxu0 0.0
  %429 = vmatprep.subr.mxu0 0.0
  %430 = vmatpush1.msra.mxu0 0.0
  %431 = vmatprep.subr.mxu0 0.0
  %432 = vmatpush1.msra.mxu0 0.0
  %433 = vmatprep.subr.mxu0 0.0
  %434 = vmatpush1.msra.mxu0 0.0
  %435 = vmatprep.subr.mxu0 0.0
  %436 = vmatpush1.msra.mxu0 0.0
  %437 = vmatprep.subr.mxu0 0.0
  %438 = vmatpush1.msra.mxu0 0.0
  %439 = vmatprep.subr.mxu0 0.0
  %440 = vmatpush1.msra.mxu0 0.0
  %441 = vmatprep.subr.mxu0 0.0
  %442 = vmatpush1.msra.mxu0 0.0
  %443 = vmatprep.subr.mxu0 0.0
  %444 = vmatpush1.msra.mxu0 0.0
  %445 = vmatprep.subr.mxu0 0.0
  %446 = vmatpush1.msra.mxu0 0.0
  %447 = vmatprep.subr.mxu0 0.0
  %448 = vmatpush1.msra.mxu0 0.0
  %449 = vmatprep.subr.mxu0 0.0
  %450 = vmatpush1.msra.mxu0 0.0
  %451 = vmatprep.subr.mxu0 0.0
  %452 = vmatpush1.msra.mxu0 0.0
  %453 = vmatprep.subr.mxu0 0.0
  %454 = vmatpush1.msra.mxu0 0.0
  %455 = vmatprep.subr.mxu0 0.0
  %456 = vmatpush1.msra.mxu0 0.0
  %457 = vmatprep.subr.mxu0 0.0
  %458 = vmatpush1.msra.mxu0 0.0
  %459 = vmatprep.subr.mxu0 0.0
  %460 = vmatpush1.msra.mxu0 0.0
  %461 = vmatprep.subr.mxu0 0.0
  %462 = vmatpush1.msra.mxu0 0.0
  %463 = vmatprep.subr.mxu0 0.0
  %464 = vmatpush1.msra.mxu0 0.0
  %465 = vmatprep.subr.mxu0 0.0
  %466 = vmatpush1.msra.mxu0 0.0
  %467 = vmatprep.subr.mxu0 0.0
  %468 = vmatpush1.msra.mxu0 0.0
  %469 = vmatprep.subr.mxu0 0.0
  %470 = vmatpush1.msra.mxu0 0.0
  %471 = vmatprep.mubr.f32.mxu0 0.0
  %v472 = vand.u32 %v26, 4294901760
  %473 = vmatmul.mubr.f32.gmra.mrb[0].mxu0 %v472
  %v474 = vpop.f32.mrb[0].mxu0
  %v475 = vadd.f32 %v403, %v474
  %v476 = vpop.f32.mrb[0].mxu0
  %477 = vdwg.mxu0
  %vm478 = vcmask 64512
  %v480 = vsel %vm478, %v20, 0
  %482 = vmatprep.subr.mxu0 0.0
  %v483 = vand.u32 %v21, 4294901760
  %484 = vmatpush1.msra.mxu0 %v483
  %485 = vmatprep.subr.mxu0 0.0
  %486 = vmatpush1.msra.mxu0 0.0
  %487 = vmatprep.subr.mxu0 0.0
  %488 = vmatpush1.msra.mxu0 0.0
  %489 = vmatprep.subr.mxu0 0.0
  %490 = vmatpush1.msra.mxu0 0.0
  %491 = vmatprep.subr.mxu0 0.0
  %492 = vmatpush1.msra.mxu0 0.0
  %493 = vmatprep.subr.mxu0 0.0
  %494 = vmatpush1.msra.mxu0 0.0
  %495 = vmatprep.subr.mxu0 0.0
  %496 = vmatpush1.msra.mxu0 0.0
  %497 = vmatprep.subr.mxu0 0.0
  %498 = vmatpush1.msra.mxu0 0.0
  %499 = vmatprep.subr.mxu0 0.0
  %500 = vmatpush1.msra.mxu0 0.0
  %501 = vmatprep.subr.mxu0 0.0
  %502 = vmatpush1.msra.mxu0 0.0
  %503 = vmatprep.subr.mxu0 0.0
  %504 = vmatpush1.msra.mxu0 0.0
  %505 = vmatprep.subr.mxu0 0.0
  %506 = vmatpush1.msra.mxu0 0.0
  %507 = vmatprep.subr.mxu0 0.0
  %508 = vmatpush1.msra.mxu0 0.0
  %509 = vmatprep.subr.mxu0 0.0
  %510 = vmatpush1.msra.mxu0 0.0
  %511 = vmatprep.subr.mxu0 0.0
  %512 = vmatpush1.msra.mxu0 0.0
  %513 = vmatprep.subr.mxu0 0.0
  %514 = vmatpush1.msra.mxu0 0.0
  %515 = vmatprep.subr.mxu0 0.0
  %516 = vmatpush1.msra.mxu0 0.0
  %517 = vmatprep.subr.mxu0 0.0
  %518 = vmatpush1.msra.mxu0 0.0
  %519 = vmatprep.subr.mxu0 0.0
  %520 = vmatpush1.msra.mxu0 0.0
  %521 = vmatprep.subr.mxu0 0.0
  %522 = vmatpush1.msra.mxu0 0.0
  %523 = vmatprep.subr.mxu0 0.0
  %524 = vmatpush1.msra.mxu0 0.0
  %525 = vmatprep.subr.mxu0 0.0
  %526 = vmatpush1.msra.mxu0 0.0
  %527 = vmatprep.subr.mxu0 0.0
  %528 = vmatpush1.msra.mxu0 0.0
  %529 = vmatprep.subr.mxu0 0.0
  %530 = vmatpush1.msra.mxu0 0.0
  %531 = vmatprep.subr.mxu0 0.0
  %532 = vmatpush1.msra.mxu0 0.0
  %533 = vmatprep.subr.mxu0 0.0
  %534 = vmatpush1.msra.mxu0 0.0
  %535 = vmatprep.subr.mxu0 0.0
  %536 = vmatpush1.msra.mxu0 0.0
  %537 = vmatprep.subr.mxu0 0.0
  %538 = vmatpush1.msra.mxu0 0.0
  %539 = vmatprep.subr.mxu0 0.0
  %540 = vmatpush1.msra.mxu0 0.0
  %541 = vmatprep.subr.mxu0 0.0
  %542 = vmatpush1.msra.mxu0 0.0
  %543 = vmatprep.subr.mxu0 0.0
  %544 = vmatpush1.msra.mxu0 0.0
  %545 = vmatprep.subr.mxu0 0.0
  %546 = vmatpush1.msra.mxu0 0.0
  %547 = vmatprep.mubr.f32.mxu0 0.0
  %v548 = vand.u32 %v480, 4294901760
  %v549 = vsub.f32 %v480, %v548
  %v550 = vand.u32 %v549, 4294901760
  %v551 = vsub.f32 %v549, %v550
  %v552 = vand.u32 %v551, 4294901760
  %553 = vmatmul.mubr.f32.gmra.mrb[0].mxu0 %v552
  %v554 = vpop.f32.mrb[0].mxu0
  %v555 = vadd.f32 %v475, %v554
  %v556 = vpop.f32.mrb[0].mxu0
  %557 = vdwg.mxu0
  %558 = vmatprep.subr.mxu0 0.0
  %v559 = vand.u32 %v21, 4294901760
  %v560 = vsub.f32 %v21, %v559
  %v561 = vand.u32 %v560, 4294901760
  %v562 = vsub.f32 %v560, %v561
  %v563 = vand.u32 %v562, 4294901760
  %564 = vmatpush1.msra.mxu0 %v563
  %565 = vmatprep.subr.mxu0 0.0
  %566 = vmatpush1.msra.mxu0 0.0
  %567 = vmatprep.subr.mxu0 0.0
  %568 = vmatpush1.msra.mxu0 0.0
  %569 = vmatprep.subr.mxu0 0.0
  %570 = vmatpush1.msra.mxu0 0.0
  %571 = vmatprep.subr.mxu0 0.0
  %572 = vmatpush1.msra.mxu0 0.0
  %573 = vmatprep.subr.mxu0 0.0
  %574 = vmatpush1.msra.mxu0 0.0
  %575 = vmatprep.subr.mxu0 0.0
  %576 = vmatpush1.msra.mxu0 0.0
  %577 = vmatprep.subr.mxu0 0.0
  %578 = vmatpush1.msra.mxu0 0.0
  %579 = vmatprep.subr.mxu0 0.0
  %580 = vmatpush1.msra.mxu0 0.0
  %581 = vmatprep.subr.mxu0 0.0
  %582 = vmatpush1.msra.mxu0 0.0
  %583 = vmatprep.subr.mxu0 0.0
  %584 = vmatpush1.msra.mxu0 0.0
  %585 = vmatprep.subr.mxu0 0.0
  %586 = vmatpush1.msra.mxu0 0.0
  %587 = vmatprep.subr.mxu0 0.0
  %588 = vmatpush1.msra.mxu0 0.0
  %589 = vmatprep.subr.mxu0 0.0
  %590 = vmatpush1.msra.mxu0 0.0
  %591 = vmatprep.subr.mxu0 0.0
  %592 = vmatpush1.msra.mxu0 0.0
  %593 = vmatprep.subr.mxu0 0.0
  %594 = vmatpush1.msra.mxu0 0.0
  %595 = vmatprep.subr.mxu0 0.0
  %596 = vmatpush1.msra.mxu0 0.0
  %597 = vmatprep.subr.mxu0 0.0
  %598 = vmatpush1.msra.mxu0 0.0
  %599 = vmatprep.subr.mxu0 0.0
  %600 = vmatpush1.msra.mxu0 0.0
  %601 = vmatprep.subr.mxu0 0.0
  %602 = vmatpush1.msra.mxu0 0.0
  %603 = vmatprep.subr.mxu0 0.0
  %604 = vmatpush1.msra.mxu0 0.0
  %605 = vmatprep.subr.mxu0 0.0
  %606 = vmatpush1.msra.mxu0 0.0
  %607 = vmatprep.subr.mxu0 0.0
  %608 = vmatpush1.msra.mxu0 0.0
  %609 = vmatprep.subr.mxu0 0.0
  %610 = vmatpush1.msra.mxu0 0.0
  %611 = vmatprep.subr.mxu0 0.0
  %612 = vmatpush1.msra.mxu0 0.0
  %613 = vmatprep.subr.mxu0 0.0
  %614 = vmatpush1.msra.mxu0 0.0
  %615 = vmatprep.subr.mxu0 0.0
  %616 = vmatpush1.msra.mxu0 0.0
  %617 = vmatprep.subr.mxu0 0.0
  %618 = vmatpush1.msra.mxu0 0.0
  %619 = vmatprep.subr.mxu0 0.0
  %620 = vmatpush1.msra.mxu0 0.0
  %621 = vmatprep.subr.mxu0 0.0
  %622 = vmatpush1.msra.mxu0 0.0
  %623 = vmatprep.subr.mxu0 0.0
  %624 = vmatpush1.msra.mxu0 0.0
  %625 = vmatprep.subr.mxu0 0.0
  %626 = vmatpush1.msra.mxu0 0.0
  %627 = vmatprep.mubr.f32.mxu0 0.0
  %v628 = vand.u32 %v480, 4294901760
  %629 = vmatmul.mubr.f32.gmra.mrb[0].mxu0 %v628
  %v630 = vpop.f32.mrb[0].mxu0
  %v631 = vadd.f32 %v555, %v630
  %v632 = vpop.f32.mrb[0].mxu0
  %633 = vdwg.mxu0
  %634 = vmatprep.subr.mxu0 0.0
  %v635 = vand.u32 %v21, 4294901760
  %v636 = vsub.f32 %v21, %v635
  %637 = vmatpush1.msra.mxu0 %v636
  %638 = vmatprep.subr.mxu0 0.0
  %639 = vmatpush1.msra.mxu0 0.0
  %640 = vmatprep.subr.mxu0 0.0
  %641 = vmatpush1.msra.mxu0 0.0
  %642 = vmatprep.subr.mxu0 0.0
  %643 = vmatpush1.msra.mxu0 0.0
  %644 = vmatprep.subr.mxu0 0.0
  %645 = vmatpush1.msra.mxu0 0.0
  %646 = vmatprep.subr.mxu0 0.0
  %647 = vmatpush1.msra.mxu0 0.0
  %648 = vmatprep.subr.mxu0 0.0
  %649 = vmatpush1.msra.mxu0 0.0
  %650 = vmatprep.subr.mxu0 0.0
  %651 = vmatpush1.msra.mxu0 0.0
  %652 = vmatprep.subr.mxu0 0.0
  %653 = vmatpush1.msra.mxu0 0.0
  %654 = vmatprep.subr.mxu0 0.0
  %655 = vmatpush1.msra.mxu0 0.0
  %656 = vmatprep.subr.mxu0 0.0
  %657 = vmatpush1.msra.mxu0 0.0
  %658 = vmatprep.subr.mxu0 0.0
  %659 = vmatpush1.msra.mxu0 0.0
  %660 = vmatprep.subr.mxu0 0.0
  %661 = vmatpush1.msra.mxu0 0.0
  %662 = vmatprep.subr.mxu0 0.0
  %663 = vmatpush1.msra.mxu0 0.0
  %664 = vmatprep.subr.mxu0 0.0
  %665 = vmatpush1.msra.mxu0 0.0
  %666 = vmatprep.subr.mxu0 0.0
  %667 = vmatpush1.msra.mxu0 0.0
  %668 = vmatprep.subr.mxu0 0.0
  %669 = vmatpush1.msra.mxu0 0.0
  %670 = vmatprep.subr.mxu0 0.0
  %671 = vmatpush1.msra.mxu0 0.0
  %672 = vmatprep.subr.mxu0 0.0
  %673 = vmatpush1.msra.mxu0 0.0
  %674 = vmatprep.subr.mxu0 0.0
  %675 = vmatpush1.msra.mxu0 0.0
  %676 = vmatprep.subr.mxu0 0.0
  %677 = vmatpush1.msra.mxu0 0.0
  %678 = vmatprep.subr.mxu0 0.0
  %679 = vmatpush1.msra.mxu0 0.0
  %680 = vmatprep.subr.mxu0 0.0
  %681 = vmatpush1.msra.mxu0 0.0
  %682 = vmatprep.subr.mxu0 0.0
  %683 = vmatpush1.msra.mxu0 0.0
  %684 = vmatprep.subr.mxu0 0.0
  %685 = vmatpush1.msra.mxu0 0.0
  %686 = vmatprep.subr.mxu0 0.0
  %687 = vmatpush1.msra.mxu0 0.0
  %688 = vmatprep.subr.mxu0 0.0
  %689 = vmatpush1.msra.mxu0 0.0
  %690 = vmatprep.subr.mxu0 0.0
  %691 = vmatpush1.msra.mxu0 0.0
  %692 = vmatprep.subr.mxu0 0.0
  %693 = vmatpush1.msra.mxu0 0.0
  %694 = vmatprep.subr.mxu0 0.0
  %695 = vmatpush1.msra.mxu0 0.0
  %696 = vmatprep.subr.mxu0 0.0
  %697 = vmatpush1.msra.mxu0 0.0
  %698 = vmatprep.subr.mxu0 0.0
  %699 = vmatpush1.msra.mxu0 0.0
  %700 = vmatprep.mubr.f32.mxu0 0.0
  %v701 = vand.u32 %v480, 4294901760
  %v702 = vsub.f32 %v480, %v701
  %703 = vmatmul.mubr.f32.gmra.mrb[0].mxu0 %v702
  %v704 = vpop.f32.mrb[0].mxu0
  %v705 = vadd.f32 %v631, %v704
  %v706 = vpop.f32.mrb[0].mxu0
  %707 = vdwg.mxu0
  %708 = vmatprep.subr.mxu0 0.0
  %v709 = vand.u32 %v21, 4294901760
  %710 = vmatpush1.msra.mxu0 %v709
  %711 = vmatprep.subr.mxu0 0.0
  %712 = vmatpush1.msra.mxu0 0.0
  %713 = vmatprep.subr.mxu0 0.0
  %714 = vmatpush1.msra.mxu0 0.0
  %715 = vmatprep.subr.mxu0 0.0
  %716 = vmatpush1.msra.mxu0 0.0
  %717 = vmatprep.subr.mxu0 0.0
  %718 = vmatpush1.msra.mxu0 0.0
  %719 = vmatprep.subr.mxu0 0.0
  %720 = vmatpush1.msra.mxu0 0.0
  %721 = vmatprep.subr.mxu0 0.0
  %722 = vmatpush1.msra.mxu0 0.0
  %723 = vmatprep.subr.mxu0 0.0
  %724 = vmatpush1.msra.mxu0 0.0
  %725 = vmatprep.subr.mxu0 0.0
  %726 = vmatpush1.msra.mxu0 0.0
  %727 = vmatprep.subr.mxu0 0.0
  %728 = vmatpush1.msra.mxu0 0.0
  %729 = vmatprep.subr.mxu0 0.0
  %730 = vmatpush1.msra.mxu0 0.0
  %731 = vmatprep.subr.mxu0 0.0
  %732 = vmatpush1.msra.mxu0 0.0
  %733 = vmatprep.subr.mxu0 0.0
  %734 = vmatpush1.msra.mxu0 0.0
  %735 = vmatprep.subr.mxu0 0.0
  %736 = vmatpush1.msra.mxu0 0.0
  %737 = vmatprep.subr.mxu0 0.0
  %738 = vmatpush1.msra.mxu0 0.0
  %739 = vmatprep.subr.mxu0 0.0
  %740 = vmatpush1.msra.mxu0 0.0
  %741 = vmatprep.subr.mxu0 0.0
  %742 = vmatpush1.msra.mxu0 0.0
  %743 = vmatprep.subr.mxu0 0.0
  %744 = vmatpush1.msra.mxu0 0.0
  %745 = vmatprep.subr.mxu0 0.0
  %746 = vmatpush1.msra.mxu0 0.0
  %747 = vmatprep.subr.mxu0 0.0
  %748 = vmatpush1.msra.mxu0 0.0
  %749 = vmatprep.subr.mxu0 0.0
  %750 = vmatpush1.msra.mxu0 0.0
  %751 = vmatprep.subr.mxu0 0.0
  %752 = vmatpush1.msra.mxu0 0.0
  %753 = vmatprep.subr.mxu0 0.0
  %754 = vmatpush1.msra.mxu0 0.0
  %755 = vmatprep.subr.mxu0 0.0
  %756 = vmatpush1.msra.mxu0 0.0
  %757 = vmatprep.subr.mxu0 0.0
  %758 = vmatpush1.msra.mxu0 0.0
  %759 = vmatprep.subr.mxu0 0.0
  %760 = vmatpush1.msra.mxu0 0.0
  %761 = vmatprep.subr.mxu0 0.0
  %762 = vmatpush1.msra.mxu0 0.0
  %763 = vmatprep.subr.mxu0 0.0
  %764 = vmatpush1.msra.mxu0 0.0
  %765 = vmatprep.subr.mxu0 0.0
  %766 = vmatpush1.msra.mxu0 0.0
  %767 = vmatprep.subr.mxu0 0.0
  %768 = vmatpush1.msra.mxu0 0.0
  %769 = vmatprep.subr.mxu0 0.0
  %770 = vmatpush1.msra.mxu0 0.0
  %771 = vmatprep.subr.mxu0 0.0
  %772 = vmatpush1.msra.mxu0 0.0
  %773 = vmatprep.mubr.f32.mxu0 0.0
  %v774 = vand.u32 %v480, 4294901760
  %v775 = vsub.f32 %v480, %v774
  %v776 = vand.u32 %v775, 4294901760
  %777 = vmatmul.mubr.f32.gmra.mrb[0].mxu0 %v776
  %v778 = vpop.f32.mrb[0].mxu0
  %v779 = vadd.f32 %v705, %v778
  %v780 = vpop.f32.mrb[0].mxu0
  %781 = vdwg.mxu0
  %782 = vmatprep.subr.mxu0 0.0
  %v783 = vand.u32 %v21, 4294901760
  %v784 = vsub.f32 %v21, %v783
  %v785 = vand.u32 %v784, 4294901760
  %786 = vmatpush1.msra.mxu0 %v785
  %787 = vmatprep.subr.mxu0 0.0
  %788 = vmatpush1.msra.mxu0 0.0
  %789 = vmatprep.subr.mxu0 0.0
  %790 = vmatpush1.msra.mxu0 0.0
  %791 = vmatprep.subr.mxu0 0.0
  %792 = vmatpush1.msra.mxu0 0.0
  %793 = vmatprep.subr.mxu0 0.0
  %794 = vmatpush1.msra.mxu0 0.0
  %795 = vmatprep.subr.mxu0 0.0
  %796 = vmatpush1.msra.mxu0 0.0
  %797 = vmatprep.subr.mxu0 0.0
  %798 = vmatpush1.msra.mxu0 0.0
  %799 = vmatprep.subr.mxu0 0.0
  %800 = vmatpush1.msra.mxu0 0.0
  %801 = vmatprep.subr.mxu0 0.0
  %802 = vmatpush1.msra.mxu0 0.0
  %803 = vmatprep.subr.mxu0 0.0
  %804 = vmatpush1.msra.mxu0 0.0
  %805 = vmatprep.subr.mxu0 0.0
  %806 = vmatpush1.msra.mxu0 0.0
  %807 = vmatprep.subr.mxu0 0.0
  %808 = vmatpush1.msra.mxu0 0.0
  %809 = vmatprep.subr.mxu0 0.0
  %810 = vmatpush1.msra.mxu0 0.0
  %811 = vmatprep.subr.mxu0 0.0
  %812 = vmatpush1.msra.mxu0 0.0
  %813 = vmatprep.subr.mxu0 0.0
  %814 = vmatpush1.msra.mxu0 0.0
  %815 = vmatprep.subr.mxu0 0.0
  %816 = vmatpush1.msra.mxu0 0.0
  %817 = vmatprep.subr.mxu0 0.0
  %818 = vmatpush1.msra.mxu0 0.0
  %819 = vmatprep.subr.mxu0 0.0
  %820 = vmatpush1.msra.mxu0 0.0
  %821 = vmatprep.subr.mxu0 0.0
  %822 = vmatpush1.msra.mxu0 0.0
  %823 = vmatprep.subr.mxu0 0.0
  %824 = vmatpush1.msra.mxu0 0.0
  %825 = vmatprep.subr.mxu0 0.0
  %826 = vmatpush1.msra.mxu0 0.0
  %827 = vmatprep.subr.mxu0 0.0
  %828 = vmatpush1.msra.mxu0 0.0
  %829 = vmatprep.subr.mxu0 0.0
  %830 = vmatpush1.msra.mxu0 0.0
  %831 = vmatprep.subr.mxu0 0.0
  %832 = vmatpush1.msra.mxu0 0.0
  %833 = vmatprep.subr.mxu0 0.0
  %834 = vmatpush1.msra.mxu0 0.0
  %835 = vmatprep.subr.mxu0 0.0
  %836 = vmatpush1.msra.mxu0 0.0
  %837 = vmatprep.subr.mxu0 0.0
  %838 = vmatpush1.msra.mxu0 0.0
  %839 = vmatprep.subr.mxu0 0.0
  %840 = vmatpush1.msra.mxu0 0.0
  %841 = vmatprep.subr.mxu0 0.0
  %842 = vmatpush1.msra.mxu0 0.0
  %843 = vmatprep.subr.mxu0 0.0
  %844 = vmatpush1.msra.mxu0 0.0
  %845 = vmatprep.subr.mxu0 0.0
  %846 = vmatpush1.msra.mxu0 0.0
  %847 = vmatprep.subr.mxu0 0.0
  %848 = vmatpush1.msra.mxu0 0.0
  %849 = vmatprep.mubr.f32.mxu0 0.0
  %v850 = vand.u32 %v480, 4294901760
  %851 = vmatmul.mubr.f32.gmra.mrb[0].mxu0 %v850
  %v852 = vpop.f32.mrb[0].mxu0
  %v853 = vadd.f32 %v779, %v852
  %v854 = vpop.f32.mrb[0].mxu0
  %855 = vdwg.mxu0
  %856 = vmatprep.subr.mxu0 0.0
  %v857 = vand.u32 %v21, 4294901760
  %858 = vmatpush1.msra.mxu0 %v857
  %859 = vmatprep.subr.mxu0 0.0
  %860 = vmatpush1.msra.mxu0 0.0
  %861 = vmatprep.subr.mxu0 0.0
  %862 = vmatpush1.msra.mxu0 0.0
  %863 = vmatprep.subr.mxu0 0.0
  %864 = vmatpush1.msra.mxu0 0.0
  %865 = vmatprep.subr.mxu0 0.0
  %866 = vmatpush1.msra.mxu0 0.0
  %867 = vmatprep.subr.mxu0 0.0
  %868 = vmatpush1.msra.mxu0 0.0
  %869 = vmatprep.subr.mxu0 0.0
  %870 = vmatpush1.msra.mxu0 0.0
  %871 = vmatprep.subr.mxu0 0.0
  %872 = vmatpush1.msra.mxu0 0.0
  %873 = vmatprep.subr.mxu0 0.0
  %874 = vmatpush1.msra.mxu0 0.0
  %875 = vmatprep.subr.mxu0 0.0
  %876 = vmatpush1.msra.mxu0 0.0
  %877 = vmatprep.subr.mxu0 0.0
  %878 = vmatpush1.msra.mxu0 0.0
  %879 = vmatprep.subr.mxu0 0.0
  %880 = vmatpush1.msra.mxu0 0.0
  %881 = vmatprep.subr.mxu0 0.0
  %882 = vmatpush1.msra.mxu0 0.0
  %883 = vmatprep.subr.mxu0 0.0
  %884 = vmatpush1.msra.mxu0 0.0
  %885 = vmatprep.subr.mxu0 0.0
  %886 = vmatpush1.msra.mxu0 0.0
  %887 = vmatprep.subr.mxu0 0.0
  %888 = vmatpush1.msra.mxu0 0.0
  %889 = vmatprep.subr.mxu0 0.0
  %890 = vmatpush1.msra.mxu0 0.0
  %891 = vmatprep.subr.mxu0 0.0
  %892 = vmatpush1.msra.mxu0 0.0
  %893 = vmatprep.subr.mxu0 0.0
  %894 = vmatpush1.msra.mxu0 0.0
  %895 = vmatprep.subr.mxu0 0.0
  %896 = vmatpush1.msra.mxu0 0.0
  %897 = vmatprep.subr.mxu0 0.0
  %898 = vmatpush1.msra.mxu0 0.0
  %899 = vmatprep.subr.mxu0 0.0
  %900 = vmatpush1.msra.mxu0 0.0
  %901 = vmatprep.subr.mxu0 0.0
  %902 = vmatpush1.msra.mxu0 0.0
  %903 = vmatprep.subr.mxu0 0.0
  %904 = vmatpush1.msra.mxu0 0.0
  %905 = vmatprep.subr.mxu0 0.0
  %906 = vmatpush1.msra.mxu0 0.0
  %907 = vmatprep.subr.mxu0 0.0
  %908 = vmatpush1.msra.mxu0 0.0
  %909 = vmatprep.subr.mxu0 0.0
  %910 = vmatpush1.msra.mxu0 0.0
  %911 = vmatprep.subr.mxu0 0.0
  %912 = vmatpush1.msra.mxu0 0.0
  %913 = vmatprep.subr.mxu0 0.0
  %914 = vmatpush1.msra.mxu0 0.0
  %915 = vmatprep.subr.mxu0 0.0
  %916 = vmatpush1.msra.mxu0 0.0
  %917 = vmatprep.subr.mxu0 0.0
  %918 = vmatpush1.msra.mxu0 0.0
  %919 = vmatprep.subr.mxu0 0.0
  %920 = vmatpush1.msra.mxu0 0.0
  %921 = vmatprep.mubr.f32.mxu0 0.0
  %v922 = vand.u32 %v480, 4294901760
  %923 = vmatmul.mubr.f32.gmra.mrb[0].mxu0 %v922
  %v924 = vpop.f32.mrb[0].mxu0
  %v925 = vadd.f32 %v853, %v924
  %v926 = vpop.f32.mrb[0].mxu0
  %927 = vdwg.mxu0
  %v928 = vld [vmem:[%s4] sm:$0xff]
  %930 = vset.pattern.permute.xlu0 0
  %931 = vperm.xlu0 %930, %v928
  %v932 = vpop.permute.xlu0 %931
  %v934 = vadd.f32 %v925, %v932
  %v935 = vmax.f32 %v934, 0.0
  %936 = vst [vmem:[%s5] sm:$0xff] %v935
  // Predicated region
  $region22: #{_conv1_impl.1} parent=0 // pred_check
    _
  $region23: #{_conv1_impl.1} parent=0 // pred_check_branch
    %938 = sbr.rel (0) target = $region25
  $region24: #{_conv1_impl.1} parent=0 // pred_region
    _
  $region25: #{_conv1_impl.1} parent=0 // pred_fallthru
    _
  // Predicated region
  $region26: #{_conv1_impl.1} parent=0 // pred_check
    _
  $region27: #{_conv1_impl.1} parent=0 // pred_check_branch
    %940 = sbr.rel (0) target = $region29
  $region28: #{_conv1_impl.1} parent=0 // pred_region
    _
  $region29: #{_conv1_impl.1} parent=0 // pred_fallthru
    _

</llo_original>
